<compile_context>
chip_gen: v6e
topology: v6e:2x2x1
jax: 0.10.0
libtpu: 0.0.40
codegen_flags: <defaults>
</compile_context>

<pallas_src>
import functools

import jax
import jax.numpy as jnp
from jax.experimental import pallas as pl
from jax.experimental.pallas import tpu as pltpu


# ----------------------------------------------------------------------------
# Kernels
# ----------------------------------------------------------------------------
def _se_gate_kernel(x_ref, w1_ref, b1_ref, w2_ref, b2_ref, gate_ref, *, inv_n):
    """Fused squeeze (spatial mean) + excitation MLP for one batch element.

    Grid = (B, num_spatial_tiles); the spatial axis is a reduction axis:
    the (1, C, 1) output block is resident across it and used as the
    accumulator (P3: init / finalize with pl.when).
    """
    j = pl.program_id(1)

    @pl.when(j == 0)
    def _init():
        gate_ref[...] = jnp.zeros_like(gate_ref)

    xs = x_ref[...].astype(jnp.float32)                      # (1, C, TN)
    gate_ref[...] += jnp.sum(xs, axis=-1, keepdims=True)     # (1, C, 1) running sum

    @pl.when(j == pl.num_programs(1) - 1)
    def _finalize():
        mean = gate_ref[...][0] * inv_n                      # (C, 1) channel means
        # Lane-broadcast the mean so both matmuls have a lane-dense RHS/output
        # (all 128 columns are identical; column 0 is the real result).
        mean_b = jnp.broadcast_to(mean, (mean.shape[0], 128))        # (C, 128)
        h = jnp.dot(w1_ref[...], mean_b,
                    preferred_element_type=jnp.float32)              # (Cr, 128)
        h = jnp.maximum(h + b1_ref[...], 0.0)                         # ReLU
        y = jnp.dot(w2_ref[...], h,
                    preferred_element_type=jnp.float32)               # (C, 128)
        y = y + b2_ref[...]
        y = 1.0 / (1.0 + jnp.exp(-y))                                 # sigmoid
        gate_ref[...] = y[:, :1][None]                                # (1, C, 1)


def _se_apply_kernel(x_ref, g_ref, o_ref):
    """out = x * gate, gate broadcast along the lane (spatial) axis."""
    o_ref[...] = (x_ref[...].astype(jnp.float32) * g_ref[...]).astype(o_ref.dtype)


# ----------------------------------------------------------------------------
# Wrapper
# ----------------------------------------------------------------------------
def _pick_tile(dim, align, max_tile):
    """Largest `align`-multiple divisor of `dim` that is <= max_tile, else full dim."""
    if dim <= max_tile:
        return dim
    t = (max_tile // align) * align
    while t >= align:
        if dim % t == 0:
            return t
        t -= align
    return dim  # full-dim block (allowed by the full-extent exception)


def channel_se_layer(x, params):
    """Forward pass of ChannelSELayer. x: (B, C, H, W) NCHW."""
    B, C, H, W = x.shape
    N = H * W
    w1 = params["w1"]            # (Cr, C)   == fc1.weight
    b1 = params["b1"]            # (Cr,)     == fc1.bias
    w2 = params["w2"]            # (C, Cr)   == fc2.weight
    b2 = params["b2"]            # (C,)      == fc2.bias
    Cr = w1.shape[0]

    tn = _pick_tile(N, 128, 512)     # lane tile: multiple of 128 (or full N)
    x3 = x.reshape(B, C, N)          # free reshape, no transpose

    # --- Kernel 1: fused squeeze (spatial mean) + fc1/ReLU/fc2/sigmoid -------
    gate = pl.pallas_call(
        functools.partial(_se_gate_kernel, inv_n=float(1.0 / N)),
        out_shape=jax.ShapeDtypeStruct((B, C, 1), jnp.float32),
        grid=(B, N // tn),
        in_specs=[
            pl.BlockSpec((1, C, tn), lambda b, j: (b, 0, j)),
            pl.BlockSpec((Cr, C), lambda b, j: (0, 0)),
            pl.BlockSpec((Cr, 1), lambda b, j: (0, 0)),
            pl.BlockSpec((C, Cr), lambda b, j: (0, 0)),
            pl.BlockSpec((C, 1), lambda b, j: (0, 0)),
        ],
        out_specs=pl.BlockSpec((1, C, 1), lambda b, j: (b, 0, 0)),
        compiler_params=pltpu.CompilerParams(
            dimension_semantics=("parallel", "arbitrary")),
    )(x3, w1, b1.reshape(Cr, 1), w2, b2.reshape(C, 1))

    # --- Kernel 2: lane-dense tiled broadcast multiply -----------------------
    R = B * C
    tr = _pick_tile(R, 8, 256)       # sublane tile: multiple of 8 (or full R)
    x2 = x.reshape(R, N)             # free reshape
    g2 = gate.reshape(R, 1)

    out = pl.pallas_call(
        _se_apply_kernel,
        out_shape=jax.ShapeDtypeStruct((R, N), x.dtype),
        grid=(R // tr, N // tn),
        in_specs=[
            pl.BlockSpec((tr, tn), lambda i, j: (i, j)),
            pl.BlockSpec((tr, 1), lambda i, j: (i, 0)),
        ],
        out_specs=pl.BlockSpec((tr, tn), lambda i, j: (i, j)),
        compiler_params=pltpu.CompilerParams(
            dimension_semantics=("parallel", "parallel")),
    )(x2, g2)

    return out.reshape(B, C, H, W)


# ----------------------------------------------------------------------------
if __name__ == "__main__":
    B, C, H, W = 2, 32, 32, 32
    REDUCTION = 8
    Cr = C // REDUCTION

    key = jax.random.PRNGKey(0)
    kx, k1, k2, k3, k4 = jax.random.split(key, 5)
    x = jax.random.normal(kx, (B, C, H, W), jnp.float32)
    params = {
        "w1": jax.random.normal(k1, (Cr, C), jnp.float32) / jnp.sqrt(jnp.float32(C)),
        "b1": 0.1 * jax.random.normal(k2, (Cr,), jnp.float32),
        "w2": jax.random.normal(k3, (C, Cr), jnp.float32) / jnp.sqrt(jnp.float32(Cr)),
        "b2": 0.1 * jax.random.normal(k4, (C,), jnp.float32),
    }

    out = jax.jit(channel_se_layer)(x, params)
    out = jax.block_until_ready(out)

    # Pure-JAX reference (matches the PyTorch forward).
    sq = x.reshape(B, C, -1).mean(axis=2)                         # (B, C)
    h = jax.nn.relu(sq @ params["w1"].T + params["b1"])           # (B, Cr)
    g = jax.nn.sigmoid(h @ params["w2"].T + params["b2"])         # (B, C)
    ref = x * g[:, :, None, None]

    assert out.shape == (B, C, H, W), out.shape
    assert bool(jnp.all(jnp.isfinite(out)))
    max_err = float(jnp.max(jnp.abs(out - ref)))
    assert max_err < 1e-2, max_err
    print("KERNEL_OK")
</pallas_src>

<mosaic_0001>
module attributes {stable_mosaic.version = 11 : i64} {
  func.func @_se_apply_kernel(%arg0: i32, %arg1: i32, %arg2: memref<64x512xf32, #tpu.memory_space<vmem>>, %arg3: memref<64x1xf32, #tpu.memory_space<vmem>>, %arg4: memref<64x512xf32, #tpu.memory_space<vmem>>) attributes {dimension_semantics = [#tpu.dimension_semantics<parallel>, #tpu.dimension_semantics<parallel>], iteration_bounds = array<i64: 1, 2>, scalar_prefetch = 0 : i64, scratch_operands = 0 : i64, tpu.core_type = #tpu.core_type<tc>, window_params = [{transform_indices = @transform_0, window_bounds = array<i64: 64, 512>}, {transform_indices = @transform_1, window_bounds = array<i64: 64, 1>}, {transform_indices = @transform_2, window_bounds = array<i64: 64, 512>}]} {
    %c0 = arith.constant 0 : index
    %c0_0 = arith.constant 0 : index
    %0 = vector.load %arg2[%c0, %c0_0] : memref<64x512xf32, #tpu.memory_space<vmem>>, vector<64x512xf32>
    %c0_1 = arith.constant 0 : index
    %c0_2 = arith.constant 0 : index
    %1 = vector.load %arg3[%c0_1, %c0_2] : memref<64x1xf32, #tpu.memory_space<vmem>>, vector<64x1xf32>
    %2 = vector.broadcast %1 : vector<64x1xf32> to vector<64x512xf32>
    %3 = arith.mulf %0, %2 : vector<64x512xf32>
    %c0_3 = arith.constant 0 : index
    %c0_4 = arith.constant 0 : index
    %4 = vector.load %arg4[%c0_3, %c0_4] : memref<64x512xf32, #tpu.memory_space<vmem>>, vector<64x512xf32>
    tpu.vector_store %arg4[%c0_3, %c0_4], %3 {strides = array<i32>} : memref<64x512xf32, #tpu.memory_space<vmem>>, vector<64x512xf32>,
    return
  }
  func.func @transform_0(%arg0: i32, %arg1: i32) -> (i32, i32) {
    %c0_i32 = arith.constant 0 : i32
    return %arg0, %arg1 : i32, i32
  }
  func.func @transform_1(%arg0: i32, %arg1: i32) -> (i32, i32) {
    %c0_i32 = arith.constant 0 : i32
    %c0_i32_0 = arith.constant 0 : i32
    return %arg0, %c0_i32 : i32, i32
  }
  func.func @transform_2(%arg0: i32, %arg1: i32) -> (i32, i32) {
    %c0_i32 = arith.constant 0 : i32
    return %arg0, %arg1 : i32, i32
  }
}

module attributes {stable_mosaic.version = 11 : i64} {
  func.func @_se_gate_kernel(%arg0: i32, %arg1: i32, %arg2: memref<1x32x512xf32, #tpu.memory_space<vmem>>, %arg3: memref<4x32xf32, #tpu.memory_space<vmem>>, %arg4: memref<4x1xf32, #tpu.memory_space<vmem>>, %arg5: memref<32x4xf32, #tpu.memory_space<vmem>>, %arg6: memref<32x1xf32, #tpu.memory_space<vmem>>, %arg7: memref<1x32x1xf32, #tpu.memory_space<vmem>>) attributes {dimension_semantics = [#tpu.dimension_semantics<parallel>, #tpu.dimension_semantics<arbitrary>], iteration_bounds = array<i64: 2, 2>, scalar_prefetch = 0 : i64, scratch_operands = 0 : i64, tpu.core_type = #tpu.core_type<tc>, window_params = [{transform_indices = @transform_0, window_bounds = array<i64: 1, 32, 512>}, {pipeline_mode = #tpu.pipeline_mode<synchronous>, transform_indices = @transform_1, window_bounds = array<i64: 4, 32>}, {pipeline_mode = #tpu.pipeline_mode<synchronous>, transform_indices = @transform_2, window_bounds = array<i64: 4, 1>}, {pipeline_mode = #tpu.pipeline_mode<synchronous>, transform_indices = @transform_3, window_bounds = array<i64: 32, 4>}, {pipeline_mode = #tpu.pipeline_mode<synchronous>, transform_indices = @transform_4, window_bounds = array<i64: 32, 1>}, {transform_indices = @transform_5, window_bounds = array<i64: 1, 32, 1>}]} {
    %c0_i32 = arith.constant 0 : i32
    %0 = arith.cmpi eq, %arg1, %c0_i32 : i32
    %1 = arith.extui %0 : i1 to i32
    %c0_i32_0 = arith.constant 0 : i32
    %2 = arith.cmpi ne, %1, %c0_i32_0 : i32
    scf.if %2 {
      %cst_10 = arith.constant 0.000000e+00 : f32
      %12 = vector.broadcast %cst_10 : f32 to vector<1x32x1xf32>
      %c0_11 = arith.constant 0 : index
      %c0_12 = arith.constant 0 : index
      %c0_13 = arith.constant 0 : index
      %13 = vector.load %arg7[%c0_11, %c0_12, %c0_13] : memref<1x32x1xf32, #tpu.memory_space<vmem>>, vector<1x32x1xf32>
      tpu.vector_store %arg7[%c0_11, %c0_12, %c0_13], %12 {strides = array<i32>} : memref<1x32x1xf32, #tpu.memory_space<vmem>>, vector<1x32x1xf32>,
    } else {
    }
    %c0 = arith.constant 0 : index
    %c0_1 = arith.constant 0 : index
    %c0_2 = arith.constant 0 : index
    %3 = vector.load %arg2[%c0, %c0_1, %c0_2] : memref<1x32x512xf32, #tpu.memory_space<vmem>>, vector<1x32x512xf32>
    %c0_3 = arith.constant 0 : index
    %c0_4 = arith.constant 0 : index
    %c0_5 = arith.constant 0 : index
    %4 = vector.load %arg7[%c0_3, %c0_4, %c0_5] : memref<1x32x1xf32, #tpu.memory_space<vmem>>, vector<1x32x1xf32>
    %cst = arith.constant dense<0.000000e+00> : vector<1x32xf32>
    %5 = vector.multi_reduction <add>, %3, %cst [2] : vector<1x32x512xf32> to vector<1x32xf32>
    %6 = vector.shape_cast %5 : vector<1x32xf32> to vector<1x32x1xf32>
    %7 = arith.addf %4, %6 : vector<1x32x1xf32>
    %c0_6 = arith.constant 0 : index
    %c0_7 = arith.constant 0 : index
    %c0_8 = arith.constant 0 : index
    %8 = vector.load %arg7[%c0_6, %c0_7, %c0_8] : memref<1x32x1xf32, #tpu.memory_space<vmem>>, vector<1x32x1xf32>
    tpu.vector_store %arg7[%c0_6, %c0_7, %c0_8], %7 {strides = array<i32>} : memref<1x32x1xf32, #tpu.memory_space<vmem>>, vector<1x32x1xf32>,
    %c1_i32 = arith.constant 1 : i32
    %9 = arith.cmpi eq, %arg1, %c1_i32 : i32
    %10 = arith.extui %9 : i1 to i32
    %c0_i32_9 = arith.constant 0 : i32
    %11 = arith.cmpi ne, %10, %c0_i32_9 : i32
    scf.if %11 {
      %c0_10 = arith.constant 0 : index
      %c0_11 = arith.constant 0 : index
      %c0_12 = arith.constant 0 : index
      %12 = vector.load %arg7[%c0_10, %c0_11, %c0_12] : memref<1x32x1xf32, #tpu.memory_space<vmem>>, vector<1x32x1xf32>
      %13 = vector.shape_cast %12 : vector<1x32x1xf32> to vector<32x1xf32>
      %cst_13 = arith.constant 9.765625E-4 : f32
      %14 = vector.broadcast %cst_13 : f32 to vector<32x1xf32>
      %15 = arith.mulf %13, %14 : vector<32x1xf32>
      %16 = vector.shape_cast %15 : vector<32x1xf32> to vector<32x1xf32>
      %17 = vector.broadcast %16 : vector<32x1xf32> to vector<32x128xf32>
      %c0_14 = arith.constant 0 : index
      %c0_15 = arith.constant 0 : index
      %18 = vector.load %arg3[%c0_14, %c0_15] : memref<4x32xf32, #tpu.memory_space<vmem>>, vector<4x32xf32>
      %cst_16 = arith.constant dense<0.000000e+00> : vector<4x128xf32>
      %19 = tpu.matmul %18, %17, %cst_16 {dimension_numbers = #tpu.dot_dimension_numbers<[1], [0], [0], [1], [0, 0, 1, 1], [], []>} : vector<4x32xf32>, vector<32x128xf32>, vector<4x128xf32> -> vector<4x128xf32>
      %c0_17 = arith.constant 0 : index
      %c0_18 = arith.constant 0 : index
      %20 = vector.load %arg4[%c0_17, %c0_18] : memref<4x1xf32, #tpu.memory_space<vmem>>, vector<4x1xf32>
      %21 = vector.broadcast %20 : vector<4x1xf32> to vector<4x128xf32>
      %22 = arith.addf %19, %21 : vector<4x128xf32>
      %cst_19 = arith.constant 0.000000e+00 : f32
      %23 = vector.broadcast %cst_19 : f32 to vector<4x128xf32>
      %24 = arith.maximumf %22, %23 : vector<4x128xf32>
      %c0_20 = arith.constant 0 : index
      %c0_21 = arith.constant 0 : index
      %25 = vector.load %arg5[%c0_20, %c0_21] : memref<32x4xf32, #tpu.memory_space<vmem>>, vector<32x4xf32>
      %cst_22 = arith.constant dense<0.000000e+00> : vector<32x128xf32>
      %26 = tpu.matmul %25, %24, %cst_22 {dimension_numbers = #tpu.dot_dimension_numbers<[1], [0], [0], [1], [0, 0, 1, 1], [], []>} : vector<32x4xf32>, vector<4x128xf32>, vector<32x128xf32> -> vector<32x128xf32>
      %c0_23 = arith.constant 0 : index
      %c0_24 = arith.constant 0 : index
      %27 = vector.load %arg6[%c0_23, %c0_24] : memref<32x1xf32, #tpu.memory_space<vmem>>, vector<32x1xf32>
      %28 = vector.broadcast %27 : vector<32x1xf32> to vector<32x128xf32>
      %29 = arith.addf %26, %28 : vector<32x128xf32>
      %cst_25 = arith.constant 0.000000e+00 : f32
      %30 = vector.broadcast %cst_25 : f32 to vector<32x128xf32>
      %31 = arith.subf %30, %29 : vector<32x128xf32>
      %32 = math.exp %31 : vector<32x128xf32>
      %cst_26 = arith.constant 1.000000e+00 : f32
      %33 = vector.broadcast %cst_26 : f32 to vector<32x128xf32>
      %34 = arith.addf %33, %32 : vector<32x128xf32>
      %cst_27 = arith.constant 1.000000e+00 : f32
      %35 = vector.broadcast %cst_27 : f32 to vector<32x128xf32>
      %36 = arith.divf %35, %34 : vector<32x128xf32>
      %37 = vector.extract_strided_slice %36 {offsets = [0, 0], sizes = [32, 1], strides = [1, 1]} : vector<32x128xf32> to vector<32x1xf32>
      %38 = vector.shape_cast %37 : vector<32x1xf32> to vector<1x32x1xf32>
      %c0_28 = arith.constant 0 : index
      %c0_29 = arith.constant 0 : index
      %c0_30 = arith.constant 0 : index
      %39 = vector.load %arg7[%c0_28, %c0_29, %c0_30] : memref<1x32x1xf32, #tpu.memory_space<vmem>>, vector<1x32x1xf32>
      tpu.vector_store %arg7[%c0_28, %c0_29, %c0_30], %38 {strides = array<i32>} : memref<1x32x1xf32, #tpu.memory_space<vmem>>, vector<1x32x1xf32>,
    } else {
    }
    return
  }
  func.func @transform_0(%arg0: i32, %arg1: i32) -> (i32, i32, i32) {
    %c0_i32 = arith.constant 0 : i32
    %c0_i32_0 = arith.constant 0 : i32
    return %arg0, %c0_i32, %arg1 : i32, i32, i32
  }
  func.func @transform_1(%arg0: i32, %arg1: i32) -> (i32, i32) {
    %c0_i32 = arith.constant 0 : i32
    %c0_i32_0 = arith.constant 0 : i32
    %c0_i32_1 = arith.constant 0 : i32
    return %c0_i32, %c0_i32_0 : i32, i32
  }
  func.func @transform_2(%arg0: i32, %arg1: i32) -> (i32, i32) {
    %c0_i32 = arith.constant 0 : i32
    %c0_i32_0 = arith.constant 0 : i32
    %c0_i32_1 = arith.constant 0 : i32
    return %c0_i32, %c0_i32_0 : i32, i32
  }
  func.func @transform_3(%arg0: i32, %arg1: i32) -> (i32, i32) {
    %c0_i32 = arith.constant 0 : i32
    %c0_i32_0 = arith.constant 0 : i32
    %c0_i32_1 = arith.constant 0 : i32
    return %c0_i32, %c0_i32_0 : i32, i32
  }
  func.func @transform_4(%arg0: i32, %arg1: i32) -> (i32, i32) {
    %c0_i32 = arith.constant 0 : i32
    %c0_i32_0 = arith.constant 0 : i32
    %c0_i32_1 = arith.constant 0 : i32
    return %c0_i32, %c0_i32_0 : i32, i32
  }
  func.func @transform_5(%arg0: i32, %arg1: i32) -> (i32, i32, i32) {
    %c0_i32 = arith.constant 0 : i32
    %c0_i32_0 = arith.constant 0 : i32
    %c0_i32_1 = arith.constant 0 : i32
    return %arg0, %c0_i32, %c0_i32_0 : i32, i32, i32
  }
}

</mosaic_0001>

<llo_original>
// kernel: channel_se_layer.3
$region0: #{channel_se_layer.3}
  #allocation0 [shape = 'u32[]', space=smem, size = 0x4, offset = 0x4, fixed_abs, tag = 'smem constant byte address 0x4 - core index']
  #allocation1 [shape = 'u32[144,128]{1,0:T(1,128)}', space=vmem, size = 0x12000, scoped, tag = 'internal scratch']
  %s0 = inlined_call_operand.vmem [shape: f32[64,1024], index: 0, kind: input, shape index: {}]
  %s1 = inlined_call_operand.vmem [shape: f32[64,1], index: 1, kind: input, shape index: {}]
  %s2 = inlined_call_operand.vmem [shape: f32[64,1024], index: 2, kind: output, shape index: {}]
  %s3 = sld [smem:[#allocation0]]
  $region83: #{channel_se_layer.3} parent=0
    _
  %s5 = ssub.s32 1, %s3
  %s6 = scalar_select 0, %s5, %s3
  $region1: #{channel_se_layer.3} parent=0
    #allocation2 [shape = 'u8[262144]{0}', space=vmem, size = 0x40000, scoped, tag = 'input window, operand 0']
    #allocation3 [shape = 'u8[262144]{0}', space=vmem, size = 0x40000, scoped, tag = 'output window, operand 0']
    loop: start=0, step=1, limit=4
    $region2: #{channel_se_layer.3} parent=1 // loop_pre_header
      _
    $region3: #{channel_se_layer.3} parent=1 // loop_header
      %s8 = sphi 0, %s12
      %p9 = scmp.ge.s32.totalorder %s8, 4
      %s15 = sphi 0, %s27
      %s16 = sphi 0, %s23
      %s17 = sphi 0, %s15
      %s18 = sphi 0, %s16
      %s19 = sphi 0, %s17
      %s20 = sphi 0, %s18
      %s32 = sphi 0, %s34
      %s35 = sphi 0, %s32
      %s36 = sphi 0, %s35
      %s52 = sphi 0, %s36
      %s58 = sphi 0, %s60
      %s61 = sphi 0, %s58
      %s62 = sphi 0, %s61
      %s78 = sphi 0, %s62
      %s86 = sphi 0, %s88
      %s89 = sphi 0, %s86
      %s90 = sphi 0, %s89
      %s106 = sphi 0, %s90
    $region4: #{channel_se_layer.3} parent=1 // loop_header_branch
      %11 = sbr.rel (%p9) target = $region8
    $region5: #{channel_se_layer.3} parent=1 // loop_body
      %s13 = ssub.s32 %s8, 1
      %s14 = ssub.s32 %s8, 2
      %s21 = sadd.s32 1, %s16
      %p22 = scmp.ge.s32.totalorder %s21, 2
      %s23 = scalar_select %p22, 0, %s21
      %s24 = sadd.s32 1, %s15
      %s25 = scalar_select %p22, %s24, %s15
      %p26 = scmp.ge.s32.totalorder %s25, 1
      %s27 = scalar_select %p26, 0, %s25
      %s28 = ssub.s32 %s15, %s27
      %s29 = ssub.s32 %s16, %s23
      %s30 = sor.u32 %s28, %s29
      %p31 = scmp.eq.s32.totalorder %s30, 0
      %s33 = sadd.s32 %s32, 1
      %s34 = scalar_select %p31, %s32, %s33
      %p37 = pneg %p31
      %p38 = scmp.eq.s32.totalorder %s8, 1
      %p39 = por %p37, %p38
      %p40 = scmp.ne.s32.totalorder %s32, %s35
      %p41 = scmp.eq.s32.totalorder %s8, 0
      %p42 = por %p40, %p41
      %p43 = scmp.ne.s32.totalorder %s32, %s35
      %p44 = scmp.eq.s32.totalorder %s13, 1
      %p45 = por %p43, %p44
      %p46 = scmp.ne.s32.totalorder %s35, %s36
      %p47 = scmp.eq.s32.totalorder %s13, 0
      %p48 = por %p46, %p47
      %p49 = scmp.ne.s32.totalorder %s35, %s36
      %p50 = scmp.eq.s32.totalorder %s14, 1
      %p51 = por %p49, %p50
      %p53 = scmp.ne.s32.totalorder %s36, %s52
      %p54 = scmp.eq.s32.totalorder %s14, 0
      %p55 = por %p53, %p54
      %s56 = ssub.s32 %s15, %s27
      %p57 = scmp.eq.s32.totalorder %s56, 0
      %s59 = sadd.s32 %s58, 1
      %s60 = scalar_select %p57, %s58, %s59
      %p63 = pneg %p57
      %p64 = scmp.eq.s32.totalorder %s8, 1
      %p65 = por %p63, %p64
      %p66 = scmp.ne.s32.totalorder %s58, %s61
      %p67 = scmp.eq.s32.totalorder %s8, 0
      %p68 = por %p66, %p67
      %p69 = scmp.ne.s32.totalorder %s58, %s61
      %p70 = scmp.eq.s32.totalorder %s13, 1
      %p71 = por %p69, %p70
      %p72 = scmp.ne.s32.totalorder %s61, %s62
      %p73 = scmp.eq.s32.totalorder %s13, 0
      %p74 = por %p72, %p73
      %p75 = scmp.ne.s32.totalorder %s61, %s62
      %p76 = scmp.eq.s32.totalorder %s14, 1
      %p77 = por %p75, %p76
      %p79 = scmp.ne.s32.totalorder %s62, %s78
      %p80 = scmp.eq.s32.totalorder %s14, 0
      %p81 = por %p79, %p80
      %s82 = ssub.s32 %s15, %s27
      %s83 = ssub.s32 %s16, %s23
      %s84 = sor.u32 %s82, %s83
      %p85 = scmp.eq.s32.totalorder %s84, 0
      %s87 = sadd.s32 %s86, 1
      %s88 = scalar_select %p85, %s86, %s87
      %p91 = pneg %p85
      %p92 = scmp.eq.s32.totalorder %s8, 1
      %p93 = por %p91, %p92
      %p94 = scmp.ne.s32.totalorder %s86, %s89
      %p95 = scmp.eq.s32.totalorder %s8, 0
      %p96 = por %p94, %p95
      %p97 = scmp.ne.s32.totalorder %s86, %s89
      %p98 = scmp.eq.s32.totalorder %s13, 1
      %p99 = por %p97, %p98
      %p100 = scmp.ne.s32.totalorder %s89, %s90
      %p101 = scmp.eq.s32.totalorder %s13, 0
      %p102 = por %p100, %p101
      %p103 = scmp.ne.s32.totalorder %s89, %s90
      %p104 = scmp.eq.s32.totalorder %s14, 1
      %p105 = por %p103, %p104
      %p107 = scmp.ne.s32.totalorder %s90, %s106
      %p108 = scmp.eq.s32.totalorder %s14, 0
      %p109 = por %p107, %p108
      %p110 = scmp.le.s32.totalorder 1, %s8
      %p111 = scmp.lt.s32.totalorder %s8, 3
      %p112 = pnand %p110, %p111
      %p113 = pneg %p112
      // Predicated region
      $region9: #{channel_se_layer.3} parent=5 // pred_check
        _
      $region10: #{channel_se_layer.3} parent=5 // pred_check_branch
        %115 = sbr.rel (%p112) target = $region12
      $region11: #{channel_se_layer.3} parent=5 // pred_region
        %s116 = ssub.s32 %s8, 1
        // Predicated region
        $region13: #{channel_se_layer.3} parent=11 // pred_check
          %p117 = pneg %p74
        $region14: #{channel_se_layer.3} parent=11 // pred_check_branch
          %119 = sbr.rel (%p117) target = $region16
        $region15: #{channel_se_layer.3} parent=11 // pred_region
          %s120 = smul.u32 8, %s17
          %p121 = scmp.lt.s32.totalorder %s120, 7
          %s122 = scalar_select %p121, %s120, 7
          %s123 = smul.addr %s122, 8
          %s124 = scalar_lea.vmem %s1, %s123
          %s125 = smul.u32 8, %s17
        $region16: #{channel_se_layer.3} parent=11 // pred_fallthru
          _
      $region12: #{channel_se_layer.3} parent=5 // pred_fallthru
        _
      %p126 = scmp.lt.s32.totalorder %s8, 2
      // Predicated region
      $region17: #{channel_se_layer.3} parent=5 // pred_check
        %p127 = pneg %p126
      $region18: #{channel_se_layer.3} parent=5 // pred_check_branch
        %129 = sbr.rel (%p127) target = $region20
      $region19: #{channel_se_layer.3} parent=5 // pred_region
        // Predicated region
        $region21: #{channel_se_layer.3} parent=19 // pred_check
          %p130 = pneg %p42
        $region22: #{channel_se_layer.3} parent=19 // pred_check_branch
          %132 = sbr.rel (%p130) target = $region24
        $region23: #{channel_se_layer.3} parent=19 // pred_region
          %s133 = sand.u32 %s32, 1
          %s134 = sand.u32 %s32, 1
          %s135 = smul.addr %s134, 256
          %s136 = scalar_lea.vmem [#allocation2], %s135
          %s137 = smul.u32 8, %s15
          %s138 = smul.u32 4, %s16
          %s139 = smul.addr %s137, 8
          %s140 = sadd.s32 %s138, %s139
          %s141 = smul.addr %s140, 8
          %s142 = scalar_lea.vmem %s0, %s141
          // Predicated region
          $region25: #{channel_se_layer.3} parent=23 // pred_check
            _
          $region26: #{channel_se_layer.3} parent=23 // pred_check_branch
            %144 = sbr.rel (0) target = $region28
          $region27: #{channel_se_layer.3} parent=23 // pred_region
            // Predicated region
            $region29: #{channel_se_layer.3} parent=27 // pred_check
              _
            $region30: #{channel_se_layer.3} parent=27 // pred_check_branch
              %146 = sbr.rel (0) target = $region32
            $region31: #{channel_se_layer.3} parent=27 // pred_region
              loop: start=0, step=1, limit=1
              $region33: #{channel_se_layer.3} parent=31 // loop_pre_header
                _
              $region34: #{channel_se_layer.3} parent=31 // loop_header
                %s148 = sphi 0, %s152
                %p149 = scmp.ge.s32.totalorder %s148, 1
                %s153 = sphi %s142, %s142
                %s154 = sphi %s136, %s136
              $region35: #{channel_se_layer.3} parent=31 // loop_header_branch
                %151 = sbr.rel (%p149) target = $region39
              $region36: #{channel_se_layer.3} parent=31 // loop_body
                %v155 = vld [vmem:[%s153] sm:$0xff]
                %156 = vst [vmem:[%s154] sm:$0xff] %v155
                %v157 = vld [vmem:[%s153 + $0x8] sm:$0xff]
                %158 = vst [vmem:[%s154 + $0x8] sm:$0xff] %v157
                %v159 = vld [vmem:[%s153 + $0x10] sm:$0xff]
                %160 = vst [vmem:[%s154 + $0x10] sm:$0xff] %v159
                %v161 = vld [vmem:[%s153 + $0x18] sm:$0xff]
                %162 = vst [vmem:[%s154 + $0x18] sm:$0xff] %v161
                %v163 = vld [vmem:[%s153 + $0x40] sm:$0xff]
                %164 = vst [vmem:[%s154 + $0x20] sm:$0xff] %v163
                %v165 = vld [vmem:[%s153 + $0x48] sm:$0xff]
                %166 = vst [vmem:[%s154 + $0x28] sm:$0xff] %v165
                %v167 = vld [vmem:[%s153 + $0x50] sm:$0xff]
                %168 = vst [vmem:[%s154 + $0x30] sm:$0xff] %v167
                %v169 = vld [vmem:[%s153 + $0x58] sm:$0xff]
                %170 = vst [vmem:[%s154 + $0x38] sm:$0xff] %v169
                %v171 = vld [vmem:[%s153 + $0x80] sm:$0xff]
                %172 = vst [vmem:[%s154 + $0x40] sm:$0xff] %v171
                %v173 = vld [vmem:[%s153 + $0x88] sm:$0xff]
                %174 = vst [vmem:[%s154 + $0x48] sm:$0xff] %v173
                %v175 = vld [vmem:[%s153 + $0x90] sm:$0xff]
                %176 = vst [vmem:[%s154 + $0x50] sm:$0xff] %v175
                %v177 = vld [vmem:[%s153 + $0x98] sm:$0xff]
                %178 = vst [vmem:[%s154 + $0x58] sm:$0xff] %v177
                %v179 = vld [vmem:[%s153 + $0xc0] sm:$0xff]
                %180 = vst [vmem:[%s154 + $0x60] sm:$0xff] %v179
                %v181 = vld [vmem:[%s153 + $0xc8] sm:$0xff]
                %182 = vst [vmem:[%s154 + $0x68] sm:$0xff] %v181
                %v183 = vld [vmem:[%s153 + $0xd0] sm:$0xff]
                %184 = vst [vmem:[%s154 + $0x70] sm:$0xff] %v183
                %v185 = vld [vmem:[%s153 + $0xd8] sm:$0xff]
                %186 = vst [vmem:[%s154 + $0x78] sm:$0xff] %v185
                %v187 = vld [vmem:[%s153 + $0x100] sm:$0xff]
                %188 = vst [vmem:[%s154 + $0x80] sm:$0xff] %v187
                %v189 = vld [vmem:[%s153 + $0x108] sm:$0xff]
                %190 = vst [vmem:[%s154 + $0x88] sm:$0xff] %v189
                %v191 = vld [vmem:[%s153 + $0x110] sm:$0xff]
                %192 = vst [vmem:[%s154 + $0x90] sm:$0xff] %v191
                %v193 = vld [vmem:[%s153 + $0x118] sm:$0xff]
                %194 = vst [vmem:[%s154 + $0x98] sm:$0xff] %v193
                %v195 = vld [vmem:[%s153 + $0x140] sm:$0xff]
                %196 = vst [vmem:[%s154 + $0xa0] sm:$0xff] %v195
                %v197 = vld [vmem:[%s153 + $0x148] sm:$0xff]
                %198 = vst [vmem:[%s154 + $0xa8] sm:$0xff] %v197
                %v199 = vld [vmem:[%s153 + $0x150] sm:$0xff]
                %200 = vst [vmem:[%s154 + $0xb0] sm:$0xff] %v199
                %v201 = vld [vmem:[%s153 + $0x158] sm:$0xff]
                %202 = vst [vmem:[%s154 + $0xb8] sm:$0xff] %v201
                %v203 = vld [vmem:[%s153 + $0x180] sm:$0xff]
                %204 = vst [vmem:[%s154 + $0xc0] sm:$0xff] %v203
                %v205 = vld [vmem:[%s153 + $0x188] sm:$0xff]
                %206 = vst [vmem:[%s154 + $0xc8] sm:$0xff] %v205
                %v207 = vld [vmem:[%s153 + $0x190] sm:$0xff]
                %208 = vst [vmem:[%s154 + $0xd0] sm:$0xff] %v207
                %v209 = vld [vmem:[%s153 + $0x198] sm:$0xff]
                %210 = vst [vmem:[%s154 + $0xd8] sm:$0xff] %v209
                %v211 = vld [vmem:[%s153 + $0x1c0] sm:$0xff]
                %212 = vst [vmem:[%s154 + $0xe0] sm:$0xff] %v211
                %v213 = vld [vmem:[%s153 + $0x1c8] sm:$0xff]
                %214 = vst [vmem:[%s154 + $0xe8] sm:$0xff] %v213
                %v215 = vld [vmem:[%s153 + $0x1d0] sm:$0xff]
                %216 = vst [vmem:[%s154 + $0xf0] sm:$0xff] %v215
                %v217 = vld [vmem:[%s153 + $0x1d8] sm:$0xff]
                %218 = vst [vmem:[%s154 + $0xf8] sm:$0xff] %v217
              $region37: #{channel_se_layer.3} parent=31 // loop_footer
                %s152 = sadd.s32 1, %s148
              $region38: #{channel_se_layer.3} parent=31 // loop_footer_branch
                %147 = sbr.rel target = $region34
              $region39: #{channel_se_layer.3} parent=31 // loop_exit
                _
            $region32: #{channel_se_layer.3} parent=27 // pred_fallthru
              _
            // Predicated region
            $region40: #{channel_se_layer.3} parent=27 // pred_check
              _
            $region41: #{channel_se_layer.3} parent=27 // pred_check_branch
              %220 = sbr.rel target = $region43
            $region42: #{channel_se_layer.3} parent=27 // pred_region
              _
            $region43: #{channel_se_layer.3} parent=27 // pred_fallthru
              _
          $region28: #{channel_se_layer.3} parent=23 // pred_fallthru
            _
          %221 = vnop
        $region24: #{channel_se_layer.3} parent=19 // pred_fallthru
          _
      $region20: #{channel_se_layer.3} parent=5 // pred_fallthru
        _
      %p222 = scmp.le.s32.totalorder 1, %s8
      %p223 = scmp.lt.s32.totalorder %s8, 3
      %p224 = pnand %p222, %p223
      %p225 = pneg %p224
      // Predicated region
      $region44: #{channel_se_layer.3} parent=5 // pred_check
        _
      $region45: #{channel_se_layer.3} parent=5 // pred_check_branch
        %227 = sbr.rel (%p224) target = $region47
      $region46: #{channel_se_layer.3} parent=5 // pred_region
        %s228 = ssub.s32 %s8, 1
        %s229 = sand.u32 %s35, 1
        %s230 = sand.u32 %s35, 1
        %s231 = smul.addr %s230, 256
        %s232 = scalar_lea.vmem [#allocation2], %s231
        // Predicated region
        $region48: #{channel_se_layer.3} parent=46 // pred_check
          %p233 = pneg %p48
        $region49: #{channel_se_layer.3} parent=46 // pred_check_branch
          %235 = sbr.rel (%p233) target = $region51
        $region50: #{channel_se_layer.3} parent=46 // pred_region
          _
        $region51: #{channel_se_layer.3} parent=46 // pred_fallthru
          _
        %s236 = sand.u32 %s35, 1
        %s237 = sand.u32 %s35, 1
        %s238 = smul.addr %s237, 256
        %s239 = scalar_lea.vmem [#allocation2], %s238
        %p240 = pneg %p48
        %p241 = pneg %p45
        %s242 = smul.u32 8, %s17
        %p243 = scmp.lt.s32.totalorder %s242, 7
        %s244 = scalar_select %p243, %s242, 7
        %s245 = smul.addr %s244, 8
        %s246 = scalar_lea.vmem %s1, %s245
        %p247 = pneg %p74
        %p248 = pneg %p71
        %p249 = pneg %p102
        %p250 = pneg %p99
        %s251 = sand.u32 %s89, 1
        %s252 = sand.u32 %s89, 1
        %s253 = smul.addr %s252, 256
        %s254 = scalar_lea.vmem [#allocation3], %s253
        %s255 = smul.u32 8, %s17
        %s256 = smul.u32 4, %s18
        %s257 = smul.u32 8, %s17
        %p258 = scmp.lt.s32.totalorder %s257, 7
        %s259 = scalar_select %p258, %s257, 7
        %s260 = smul.addr %s259, 8
        %s261 = scalar_lea.vmem %s1, %s260
        %s262 = smul.u32 8, %s17
        %s263 = smul.u32 8, %s17
        %s264 = smul.u32 4, %s18
        %v265 = vld [vmem:[%s232] sm:$0xff]
        %v266 = vld [vmem:[%s232 + $0x8] sm:$0xff]
        %v267 = vld [vmem:[%s232 + $0x10] sm:$0xff]
        %v268 = vld [vmem:[%s232 + $0x18] sm:$0xff]
        %v269 = vld [vmem:[%s232 + $0x20] sm:$0xff]
        %v270 = vld [vmem:[%s232 + $0x28] sm:$0xff]
        %v271 = vld [vmem:[%s232 + $0x30] sm:$0xff]
        %v272 = vld [vmem:[%s232 + $0x38] sm:$0xff]
        %v273 = vld [vmem:[%s232 + $0x40] sm:$0xff]
        %v274 = vld [vmem:[%s232 + $0x48] sm:$0xff]
        %v275 = vld [vmem:[%s232 + $0x50] sm:$0xff]
        %v276 = vld [vmem:[%s232 + $0x58] sm:$0xff]
        %v277 = vld [vmem:[%s232 + $0x60] sm:$0xff]
        %v278 = vld [vmem:[%s232 + $0x68] sm:$0xff]
        %v279 = vld [vmem:[%s232 + $0x70] sm:$0xff]
        %v280 = vld [vmem:[%s232 + $0x78] sm:$0xff]
        %v281 = vld [vmem:[%s232 + $0x80] sm:$0xff]
        %v282 = vld [vmem:[%s232 + $0x88] sm:$0xff]
        %v283 = vld [vmem:[%s232 + $0x90] sm:$0xff]
        %v284 = vld [vmem:[%s232 + $0x98] sm:$0xff]
        %v285 = vld [vmem:[%s232 + $0xa0] sm:$0xff]
        %v286 = vld [vmem:[%s232 + $0xa8] sm:$0xff]
        %v287 = vld [vmem:[%s232 + $0xb0] sm:$0xff]
        %v288 = vld [vmem:[%s232 + $0xb8] sm:$0xff]
        %v289 = vld [vmem:[%s232 + $0xc0] sm:$0xff]
        %v290 = vld [vmem:[%s232 + $0xc8] sm:$0xff]
        %v291 = vld [vmem:[%s232 + $0xd0] sm:$0xff]
        %v292 = vld [vmem:[%s232 + $0xd8] sm:$0xff]
        %v293 = vld [vmem:[%s232 + $0xe0] sm:$0xff]
        %v294 = vld [vmem:[%s232 + $0xe8] sm:$0xff]
        %v295 = vld [vmem:[%s232 + $0xf0] sm:$0xff]
        %v296 = vld [vmem:[%s232 + $0xf8] sm:$0xff]
        %v297 = vld [vmem:[%s261] sm:$0xff]
        %v298 = vld [vmem:[%s261 + $0x8] sm:$0xff]
        %v299 = vld [vmem:[%s261 + $0x10] sm:$0xff]
        %v300 = vld [vmem:[%s261 + $0x18] sm:$0xff]
        %v301 = vld [vmem:[%s261 + $0x20] sm:$0xff]
        %v302 = vld [vmem:[%s261 + $0x28] sm:$0xff]
        %v303 = vld [vmem:[%s261 + $0x30] sm:$0xff]
        %v304 = vld [vmem:[%s261 + $0x38] sm:$0xff]
        %306 = vset.pattern.permute.xlu0 0
        %307 = vperm.xlu0 %306, %v297
        %v308 = vpop.permute.xlu0 %307
        %311 = vset.pattern.permute.xlu0 0
        %312 = vperm.xlu0 %311, %v298
        %v313 = vpop.permute.xlu0 %312
        %316 = vset.pattern.permute.xlu0 0
        %317 = vperm.xlu0 %316, %v299
        %v318 = vpop.permute.xlu0 %317
        %321 = vset.pattern.permute.xlu0 0
        %322 = vperm.xlu0 %321, %v300
        %v323 = vpop.permute.xlu0 %322
        %326 = vset.pattern.permute.xlu0 0
        %327 = vperm.xlu0 %326, %v301
        %v328 = vpop.permute.xlu0 %327
        %331 = vset.pattern.permute.xlu0 0
        %332 = vperm.xlu0 %331, %v302
        %v333 = vpop.permute.xlu0 %332
        %336 = vset.pattern.permute.xlu0 0
        %337 = vperm.xlu0 %336, %v303
        %v338 = vpop.permute.xlu0 %337
        %341 = vset.pattern.permute.xlu0 0
        %342 = vperm.xlu0 %341, %v304
        %v343 = vpop.permute.xlu0 %342
        %v345 = vmul.f32 %v265, %v308
        %v346 = vmul.f32 %v266, %v308
        %v347 = vmul.f32 %v267, %v308
        %v348 = vmul.f32 %v268, %v308
        %v349 = vmul.f32 %v269, %v313
        %v350 = vmul.f32 %v270, %v313
        %v351 = vmul.f32 %v271, %v313
        %v352 = vmul.f32 %v272, %v313
        %v353 = vmul.f32 %v273, %v318
        %v354 = vmul.f32 %v274, %v318
        %v355 = vmul.f32 %v275, %v318
        %v356 = vmul.f32 %v276, %v318
        %v357 = vmul.f32 %v277, %v323
        %v358 = vmul.f32 %v278, %v323
        %v359 = vmul.f32 %v279, %v323
        %v360 = vmul.f32 %v280, %v323
        %v361 = vmul.f32 %v281, %v328
        %v362 = vmul.f32 %v282, %v328
        %v363 = vmul.f32 %v283, %v328
        %v364 = vmul.f32 %v284, %v328
        %v365 = vmul.f32 %v285, %v333
        %v366 = vmul.f32 %v286, %v333
        %v367 = vmul.f32 %v287, %v333
        %v368 = vmul.f32 %v288, %v333
        %v369 = vmul.f32 %v289, %v338
        %v370 = vmul.f32 %v290, %v338
        %v371 = vmul.f32 %v291, %v338
        %v372 = vmul.f32 %v292, %v338
        %v373 = vmul.f32 %v293, %v343
        %v374 = vmul.f32 %v294, %v343
        %v375 = vmul.f32 %v295, %v343
        %v376 = vmul.f32 %v296, %v343
        %377 = vst [vmem:[%s254] sm:$0xff] %v345
        %378 = vst [vmem:[%s254 + $0x8] sm:$0xff] %v346
        %379 = vst [vmem:[%s254 + $0x10] sm:$0xff] %v347
        %380 = vst [vmem:[%s254 + $0x18] sm:$0xff] %v348
        %381 = vst [vmem:[%s254 + $0x20] sm:$0xff] %v349
        %382 = vst [vmem:[%s254 + $0x28] sm:$0xff] %v350
        %383 = vst [vmem:[%s254 + $0x30] sm:$0xff] %v351
        %384 = vst [vmem:[%s254 + $0x38] sm:$0xff] %v352
        %385 = vst [vmem:[%s254 + $0x40] sm:$0xff] %v353
        %386 = vst [vmem:[%s254 + $0x48] sm:$0xff] %v354
        %387 = vst [vmem:[%s254 + $0x50] sm:$0xff] %v355
        %388 = vst [vmem:[%s254 + $0x58] sm:$0xff] %v356
        %389 = vst [vmem:[%s254 + $0x60] sm:$0xff] %v357
        %390 = vst [vmem:[%s254 + $0x68] sm:$0xff] %v358
        %391 = vst [vmem:[%s254 + $0x70] sm:$0xff] %v359
        %392 = vst [vmem:[%s254 + $0x78] sm:$0xff] %v360
        %393 = vst [vmem:[%s254 + $0x80] sm:$0xff] %v361
        %394 = vst [vmem:[%s254 + $0x88] sm:$0xff] %v362
        %395 = vst [vmem:[%s254 + $0x90] sm:$0xff] %v363
        %396 = vst [vmem:[%s254 + $0x98] sm:$0xff] %v364
        %397 = vst [vmem:[%s254 + $0xa0] sm:$0xff] %v365
        %398 = vst [vmem:[%s254 + $0xa8] sm:$0xff] %v366
        %399 = vst [vmem:[%s254 + $0xb0] sm:$0xff] %v367
        %400 = vst [vmem:[%s254 + $0xb8] sm:$0xff] %v368
        %401 = vst [vmem:[%s254 + $0xc0] sm:$0xff] %v369
        %402 = vst [vmem:[%s254 + $0xc8] sm:$0xff] %v370
        %403 = vst [vmem:[%s254 + $0xd0] sm:$0xff] %v371
        %404 = vst [vmem:[%s254 + $0xd8] sm:$0xff] %v372
        %405 = vst [vmem:[%s254 + $0xe0] sm:$0xff] %v373
        %406 = vst [vmem:[%s254 + $0xe8] sm:$0xff] %v374
        %407 = vst [vmem:[%s254 + $0xf0] sm:$0xff] %v375
        %408 = vst [vmem:[%s254 + $0xf8] sm:$0xff] %v376
        %s409 = sand.u32 %s89, 1
        %s410 = sand.u32 %s89, 1
        %s411 = smul.addr %s410, 256
        %s412 = scalar_lea.vmem [#allocation3], %s411
        // Predicated region
        $region52: #{channel_se_layer.3} parent=46 // pred_check
          %p413 = pneg %p99
        $region53: #{channel_se_layer.3} parent=46 // pred_check_branch
          %415 = sbr.rel (%p413) target = $region55
        $region54: #{channel_se_layer.3} parent=46 // pred_region
          %s416 = smul.u32 8, %s17
          %s417 = smul.u32 4, %s18
          %s418 = smul.addr %s416, 8
          %s419 = sadd.s32 %s417, %s418
          %s420 = smul.addr %s419, 8
          %s421 = scalar_lea.vmem %s2, %s420
          // Predicated region
          $region56: #{channel_se_layer.3} parent=54 // pred_check
            _
          $region57: #{channel_se_layer.3} parent=54 // pred_check_branch
            %423 = sbr.rel (0) target = $region59
          $region58: #{channel_se_layer.3} parent=54 // pred_region
            // Predicated region
            $region60: #{channel_se_layer.3} parent=58 // pred_check
              _
            $region61: #{channel_se_layer.3} parent=58 // pred_check_branch
              %425 = sbr.rel (0) target = $region63
            $region62: #{channel_se_layer.3} parent=58 // pred_region
              loop: start=0, step=1, limit=1
              $region64: #{channel_se_layer.3} parent=62 // loop_pre_header
                _
              $region65: #{channel_se_layer.3} parent=62 // loop_header
                %s427 = sphi 0, %s431
                %p428 = scmp.ge.s32.totalorder %s427, 1
                %s432 = sphi %s412, %s412
                %s433 = sphi %s421, %s421
              $region66: #{channel_se_layer.3} parent=62 // loop_header_branch
                %430 = sbr.rel (%p428) target = $region70
              $region67: #{channel_se_layer.3} parent=62 // loop_body
                %v434 = vld [vmem:[%s432] sm:$0xff]
                %435 = vst [vmem:[%s433] sm:$0xff] %v434
                %v436 = vld [vmem:[%s432 + $0x8] sm:$0xff]
                %437 = vst [vmem:[%s433 + $0x8] sm:$0xff] %v436
                %v438 = vld [vmem:[%s432 + $0x10] sm:$0xff]
                %439 = vst [vmem:[%s433 + $0x10] sm:$0xff] %v438
                %v440 = vld [vmem:[%s432 + $0x18] sm:$0xff]
                %441 = vst [vmem:[%s433 + $0x18] sm:$0xff] %v440
                %v442 = vld [vmem:[%s432 + $0x20] sm:$0xff]
                %443 = vst [vmem:[%s433 + $0x40] sm:$0xff] %v442
                %v444 = vld [vmem:[%s432 + $0x28] sm:$0xff]
                %445 = vst [vmem:[%s433 + $0x48] sm:$0xff] %v444
                %v446 = vld [vmem:[%s432 + $0x30] sm:$0xff]
                %447 = vst [vmem:[%s433 + $0x50] sm:$0xff] %v446
                %v448 = vld [vmem:[%s432 + $0x38] sm:$0xff]
                %449 = vst [vmem:[%s433 + $0x58] sm:$0xff] %v448
                %v450 = vld [vmem:[%s432 + $0x40] sm:$0xff]
                %451 = vst [vmem:[%s433 + $0x80] sm:$0xff] %v450
                %v452 = vld [vmem:[%s432 + $0x48] sm:$0xff]
                %453 = vst [vmem:[%s433 + $0x88] sm:$0xff] %v452
                %v454 = vld [vmem:[%s432 + $0x50] sm:$0xff]
                %455 = vst [vmem:[%s433 + $0x90] sm:$0xff] %v454
                %v456 = vld [vmem:[%s432 + $0x58] sm:$0xff]
                %457 = vst [vmem:[%s433 + $0x98] sm:$0xff] %v456
                %v458 = vld [vmem:[%s432 + $0x60] sm:$0xff]
                %459 = vst [vmem:[%s433 + $0xc0] sm:$0xff] %v458
                %v460 = vld [vmem:[%s432 + $0x68] sm:$0xff]
                %461 = vst [vmem:[%s433 + $0xc8] sm:$0xff] %v460
                %v462 = vld [vmem:[%s432 + $0x70] sm:$0xff]
                %463 = vst [vmem:[%s433 + $0xd0] sm:$0xff] %v462
                %v464 = vld [vmem:[%s432 + $0x78] sm:$0xff]
                %465 = vst [vmem:[%s433 + $0xd8] sm:$0xff] %v464
                %v466 = vld [vmem:[%s432 + $0x80] sm:$0xff]
                %467 = vst [vmem:[%s433 + $0x100] sm:$0xff] %v466
                %v468 = vld [vmem:[%s432 + $0x88] sm:$0xff]
                %469 = vst [vmem:[%s433 + $0x108] sm:$0xff] %v468
                %v470 = vld [vmem:[%s432 + $0x90] sm:$0xff]
                %471 = vst [vmem:[%s433 + $0x110] sm:$0xff] %v470
                %v472 = vld [vmem:[%s432 + $0x98] sm:$0xff]
                %473 = vst [vmem:[%s433 + $0x118] sm:$0xff] %v472
                %v474 = vld [vmem:[%s432 + $0xa0] sm:$0xff]
                %475 = vst [vmem:[%s433 + $0x140] sm:$0xff] %v474
                %v476 = vld [vmem:[%s432 + $0xa8] sm:$0xff]
                %477 = vst [vmem:[%s433 + $0x148] sm:$0xff] %v476
                %v478 = vld [vmem:[%s432 + $0xb0] sm:$0xff]
                %479 = vst [vmem:[%s433 + $0x150] sm:$0xff] %v478
                %v480 = vld [vmem:[%s432 + $0xb8] sm:$0xff]
                %481 = vst [vmem:[%s433 + $0x158] sm:$0xff] %v480
                %v482 = vld [vmem:[%s432 + $0xc0] sm:$0xff]
                %483 = vst [vmem:[%s433 + $0x180] sm:$0xff] %v482
                %v484 = vld [vmem:[%s432 + $0xc8] sm:$0xff]
                %485 = vst [vmem:[%s433 + $0x188] sm:$0xff] %v484
                %v486 = vld [vmem:[%s432 + $0xd0] sm:$0xff]
                %487 = vst [vmem:[%s433 + $0x190] sm:$0xff] %v486
                %v488 = vld [vmem:[%s432 + $0xd8] sm:$0xff]
                %489 = vst [vmem:[%s433 + $0x198] sm:$0xff] %v488
                %v490 = vld [vmem:[%s432 + $0xe0] sm:$0xff]
                %491 = vst [vmem:[%s433 + $0x1c0] sm:$0xff] %v490
                %v492 = vld [vmem:[%s432 + $0xe8] sm:$0xff]
                %493 = vst [vmem:[%s433 + $0x1c8] sm:$0xff] %v492
                %v494 = vld [vmem:[%s432 + $0xf0] sm:$0xff]
                %495 = vst [vmem:[%s433 + $0x1d0] sm:$0xff] %v494
                %v496 = vld [vmem:[%s432 + $0xf8] sm:$0xff]
                %497 = vst [vmem:[%s433 + $0x1d8] sm:$0xff] %v496
              $region68: #{channel_se_layer.3} parent=62 // loop_footer
                %s431 = sadd.s32 1, %s427
              $region69: #{channel_se_layer.3} parent=62 // loop_footer_branch
                %426 = sbr.rel target = $region65
              $region70: #{channel_se_layer.3} parent=62 // loop_exit
                _
            $region63: #{channel_se_layer.3} parent=58 // pred_fallthru
              _
            // Predicated region
            $region71: #{channel_se_layer.3} parent=58 // pred_check
              _
            $region72: #{channel_se_layer.3} parent=58 // pred_check_branch
              %499 = sbr.rel target = $region74
            $region73: #{channel_se_layer.3} parent=58 // pred_region
              _
            $region74: #{channel_se_layer.3} parent=58 // pred_fallthru
              _
          $region59: #{channel_se_layer.3} parent=54 // pred_fallthru
            _
          %500 = vnop
        $region55: #{channel_se_layer.3} parent=46 // pred_fallthru
          _
      $region47: #{channel_se_layer.3} parent=5 // pred_fallthru
        _
      %p501 = scmp.le.s32.totalorder 2, %s8
      // Predicated region
      $region75: #{channel_se_layer.3} parent=5 // pred_check
        %p502 = pneg %p501
      $region76: #{channel_se_layer.3} parent=5 // pred_check_branch
        %504 = sbr.rel (%p502) target = $region78
      $region77: #{channel_se_layer.3} parent=5 // pred_region
        %s505 = ssub.s32 %s8, 2
        // Predicated region
        $region79: #{channel_se_layer.3} parent=77 // pred_check
          %p506 = pneg %p105
        $region80: #{channel_se_layer.3} parent=77 // pred_check_branch
          %508 = sbr.rel (%p506) target = $region82
        $region81: #{channel_se_layer.3} parent=77 // pred_region
          %s509 = sand.u32 %s90, 1
          %s510 = sand.u32 %s90, 1
          %s511 = smul.addr %s510, 256
          %s512 = scalar_lea.vmem [#allocation3], %s511
        $region82: #{channel_se_layer.3} parent=77 // pred_fallthru
          _
      $region78: #{channel_se_layer.3} parent=5 // pred_fallthru
        _
    $region6: #{channel_se_layer.3} parent=1 // loop_footer
      %s12 = sadd.s32 1, %s8
    $region7: #{channel_se_layer.3} parent=1 // loop_footer_branch
      %7 = sbr.rel target = $region3
    $region8: #{channel_se_layer.3} parent=1 // loop_exit
      _

// kernel: channel_se_layer.2
$region0: #{channel_se_layer.2}
  #allocation0 [shape = 'u32[]', space=smem, size = 0x4, offset = 0x4, fixed_abs, tag = 'smem constant byte address 0x4 - core index']
  #allocation1 [shape = 'u32[144,128]{1,0:T(1,128)}', space=vmem, size = 0x12000, scoped, tag = 'internal scratch']
  %s0 = inlined_call_operand.vmem [shape: f32[2,32,1024], index: 0, kind: input, shape index: {}]
  %s1 = inlined_call_operand.vmem [shape: f32[4,32], index: 1, kind: input, shape index: {}]
  %s2 = inlined_call_operand.vmem [shape: f32[4,1], index: 2, kind: input, shape index: {}]
  %s3 = inlined_call_operand.vmem [shape: f32[32,4], index: 3, kind: input, shape index: {}]
  %s4 = inlined_call_operand.vmem [shape: f32[32,1], index: 4, kind: input, shape index: {}]
  %s5 = inlined_call_operand.vmem [shape: f32[2,32,1], index: 5, kind: output, shape index: {}]
  %s6 = sld [smem:[#allocation0]]
  $region84: #{channel_se_layer.2} parent=0
    _
  %s8 = ssub.s32 1, %s6
  %s9 = scalar_select 0, %s8, %s6
  $region1: #{channel_se_layer.2} parent=0
    #allocation2 [shape = 'u8[131072]{0}', space=vmem, size = 0x20000, scoped, tag = 'input window, operand 0']
    loop: start=0, step=1, limit=6
    $region2: #{channel_se_layer.2} parent=1 // loop_pre_header
      _
    $region3: #{channel_se_layer.2} parent=1 // loop_header
      %s11 = sphi 0, %s15
      %p12 = scmp.ge.s32.totalorder %s11, 6
      %s18 = sphi 0, %s30
      %s19 = sphi 0, %s26
      %s20 = sphi 0, %s18
      %s21 = sphi 0, %s19
      %s22 = sphi 0, %s20
      %s23 = sphi 0, %s21
      %s35 = sphi 0, %s37
      %s38 = sphi 0, %s35
      %s39 = sphi 0, %s38
      %s55 = sphi 0, %s39
      %s59 = sphi 0, %s59
      %s61 = sphi 0, %s59
      %s62 = sphi 0, %s61
      %s76 = sphi 0, %s62
      %s80 = sphi 0, %s80
      %s82 = sphi 0, %s80
      %s83 = sphi 0, %s82
      %s97 = sphi 0, %s83
      %s101 = sphi 0, %s101
      %s103 = sphi 0, %s101
      %s104 = sphi 0, %s103
      %s118 = sphi 0, %s104
      %s122 = sphi 0, %s122
      %s124 = sphi 0, %s122
      %s125 = sphi 0, %s124
      %s139 = sphi 0, %s125
      %s145 = sphi 0, %s147
      %s148 = sphi 0, %s145
      %s149 = sphi 0, %s148
      %s165 = sphi 0, %s149
    $region4: #{channel_se_layer.2} parent=1 // loop_header_branch
      %14 = sbr.rel (%p12) target = $region8
    $region5: #{channel_se_layer.2} parent=1 // loop_body
      %s16 = ssub.s32 %s11, 1
      %s17 = ssub.s32 %s11, 2
      %s24 = sadd.s32 1, %s19
      %p25 = scmp.ge.s32.totalorder %s24, 2
      %s26 = scalar_select %p25, 0, %s24
      %s27 = sadd.s32 1, %s18
      %s28 = scalar_select %p25, %s27, %s18
      %p29 = scmp.ge.s32.totalorder %s28, 2
      %s30 = scalar_select %p29, 0, %s28
      %s31 = ssub.s32 %s18, %s30
      %s32 = ssub.s32 %s19, %s26
      %s33 = sor.u32 %s31, %s32
      %p34 = scmp.eq.s32.totalorder %s33, 0
      %s36 = sadd.s32 %s35, 1
      %s37 = scalar_select %p34, %s35, %s36
      %p40 = pneg %p34
      %p41 = scmp.eq.s32.totalorder %s11, 3
      %p42 = por %p40, %p41
      %p43 = scmp.ne.s32.totalorder %s35, %s38
      %p44 = scmp.eq.s32.totalorder %s11, 0
      %p45 = por %p43, %p44
      %p46 = scmp.ne.s32.totalorder %s35, %s38
      %p47 = scmp.eq.s32.totalorder %s16, 3
      %p48 = por %p46, %p47
      %p49 = scmp.ne.s32.totalorder %s38, %s39
      %p50 = scmp.eq.s32.totalorder %s16, 0
      %p51 = por %p49, %p50
      %p52 = scmp.ne.s32.totalorder %s38, %s39
      %p53 = scmp.eq.s32.totalorder %s17, 3
      %p54 = por %p52, %p53
      %p56 = scmp.ne.s32.totalorder %s39, %s55
      %p57 = scmp.eq.s32.totalorder %s17, 0
      %p58 = por %p56, %p57
      %s60 = sadd.s32 %s59, 1
      %p63 = scmp.eq.s32.totalorder %s11, 3
      %p64 = scmp.ne.s32.totalorder %s59, %s61
      %p65 = scmp.eq.s32.totalorder %s11, 0
      %p66 = por %p64, %p65
      %p67 = scmp.ne.s32.totalorder %s59, %s61
      %p68 = scmp.eq.s32.totalorder %s16, 3
      %p69 = por %p67, %p68
      %p70 = scmp.ne.s32.totalorder %s61, %s62
      %p71 = scmp.eq.s32.totalorder %s16, 0
      %p72 = por %p70, %p71
      %p73 = scmp.ne.s32.totalorder %s61, %s62
      %p74 = scmp.eq.s32.totalorder %s17, 3
      %p75 = por %p73, %p74
      %p77 = scmp.ne.s32.totalorder %s62, %s76
      %p78 = scmp.eq.s32.totalorder %s17, 0
      %p79 = por %p77, %p78
      %s81 = sadd.s32 %s80, 1
      %p84 = scmp.eq.s32.totalorder %s11, 3
      %p85 = scmp.ne.s32.totalorder %s80, %s82
      %p86 = scmp.eq.s32.totalorder %s11, 0
      %p87 = por %p85, %p86
      %p88 = scmp.ne.s32.totalorder %s80, %s82
      %p89 = scmp.eq.s32.totalorder %s16, 3
      %p90 = por %p88, %p89
      %p91 = scmp.ne.s32.totalorder %s82, %s83
      %p92 = scmp.eq.s32.totalorder %s16, 0
      %p93 = por %p91, %p92
      %p94 = scmp.ne.s32.totalorder %s82, %s83
      %p95 = scmp.eq.s32.totalorder %s17, 3
      %p96 = por %p94, %p95
      %p98 = scmp.ne.s32.totalorder %s83, %s97
      %p99 = scmp.eq.s32.totalorder %s17, 0
      %p100 = por %p98, %p99
      %s102 = sadd.s32 %s101, 1
      %p105 = scmp.eq.s32.totalorder %s11, 3
      %p106 = scmp.ne.s32.totalorder %s101, %s103
      %p107 = scmp.eq.s32.totalorder %s11, 0
      %p108 = por %p106, %p107
      %p109 = scmp.ne.s32.totalorder %s101, %s103
      %p110 = scmp.eq.s32.totalorder %s16, 3
      %p111 = por %p109, %p110
      %p112 = scmp.ne.s32.totalorder %s103, %s104
      %p113 = scmp.eq.s32.totalorder %s16, 0
      %p114 = por %p112, %p113
      %p115 = scmp.ne.s32.totalorder %s103, %s104
      %p116 = scmp.eq.s32.totalorder %s17, 3
      %p117 = por %p115, %p116
      %p119 = scmp.ne.s32.totalorder %s104, %s118
      %p120 = scmp.eq.s32.totalorder %s17, 0
      %p121 = por %p119, %p120
      %s123 = sadd.s32 %s122, 1
      %p126 = scmp.eq.s32.totalorder %s11, 3
      %p127 = scmp.ne.s32.totalorder %s122, %s124
      %p128 = scmp.eq.s32.totalorder %s11, 0
      %p129 = por %p127, %p128
      %p130 = scmp.ne.s32.totalorder %s122, %s124
      %p131 = scmp.eq.s32.totalorder %s16, 3
      %p132 = por %p130, %p131
      %p133 = scmp.ne.s32.totalorder %s124, %s125
      %p134 = scmp.eq.s32.totalorder %s16, 0
      %p135 = por %p133, %p134
      %p136 = scmp.ne.s32.totalorder %s124, %s125
      %p137 = scmp.eq.s32.totalorder %s17, 3
      %p138 = por %p136, %p137
      %p140 = scmp.ne.s32.totalorder %s125, %s139
      %p141 = scmp.eq.s32.totalorder %s17, 0
      %p142 = por %p140, %p141
      %s143 = ssub.s32 %s18, %s30
      %p144 = scmp.eq.s32.totalorder %s143, 0
      %s146 = sadd.s32 %s145, 1
      %s147 = scalar_select %p144, %s145, %s146
      %p150 = pneg %p144
      %p151 = scmp.eq.s32.totalorder %s11, 3
      %p152 = por %p150, %p151
      %p153 = scmp.ne.s32.totalorder %s145, %s148
      %p154 = scmp.eq.s32.totalorder %s11, 0
      %p155 = por %p153, %p154
      %p156 = scmp.ne.s32.totalorder %s145, %s148
      %p157 = scmp.eq.s32.totalorder %s16, 3
      %p158 = por %p156, %p157
      %p159 = scmp.ne.s32.totalorder %s148, %s149
      %p160 = scmp.eq.s32.totalorder %s16, 0
      %p161 = por %p159, %p160
      %p162 = scmp.ne.s32.totalorder %s148, %s149
      %p163 = scmp.eq.s32.totalorder %s17, 3
      %p164 = por %p162, %p163
      %p166 = scmp.ne.s32.totalorder %s149, %s165
      %p167 = scmp.eq.s32.totalorder %s17, 0
      %p168 = por %p166, %p167
      %p169 = scmp.le.s32.totalorder 1, %s11
      %p170 = scmp.lt.s32.totalorder %s11, 5
      %p171 = pnand %p169, %p170
      %p172 = pneg %p171
      // Predicated region
      $region9: #{channel_se_layer.2} parent=5 // pred_check
        _
      $region10: #{channel_se_layer.2} parent=5 // pred_check_branch
        %174 = sbr.rel (%p171) target = $region12
      $region11: #{channel_se_layer.2} parent=5 // pred_region
        %s175 = ssub.s32 %s11, 1
        // Predicated region
        $region13: #{channel_se_layer.2} parent=11 // pred_check
          %p176 = pneg %p72
        $region14: #{channel_se_layer.2} parent=11 // pred_check_branch
          %178 = sbr.rel (%p176) target = $region16
        $region15: #{channel_se_layer.2} parent=11 // pred_region
          _
        $region16: #{channel_se_layer.2} parent=11 // pred_fallthru
          _
        // Predicated region
        $region17: #{channel_se_layer.2} parent=11 // pred_check
          %p179 = pneg %p93
        $region18: #{channel_se_layer.2} parent=11 // pred_check_branch
          %181 = sbr.rel (%p179) target = $region20
        $region19: #{channel_se_layer.2} parent=11 // pred_region
          _
        $region20: #{channel_se_layer.2} parent=11 // pred_fallthru
          _
        // Predicated region
        $region21: #{channel_se_layer.2} parent=11 // pred_check
          %p182 = pneg %p114
        $region22: #{channel_se_layer.2} parent=11 // pred_check_branch
          %184 = sbr.rel (%p182) target = $region24
        $region23: #{channel_se_layer.2} parent=11 // pred_region
          _
        $region24: #{channel_se_layer.2} parent=11 // pred_fallthru
          _
        // Predicated region
        $region25: #{channel_se_layer.2} parent=11 // pred_check
          %p185 = pneg %p135
        $region26: #{channel_se_layer.2} parent=11 // pred_check_branch
          %187 = sbr.rel (%p185) target = $region28
        $region27: #{channel_se_layer.2} parent=11 // pred_region
          _
        $region28: #{channel_se_layer.2} parent=11 // pred_fallthru
          _
      $region12: #{channel_se_layer.2} parent=5 // pred_fallthru
        _
      %p188 = scmp.lt.s32.totalorder %s11, 4
      // Predicated region
      $region29: #{channel_se_layer.2} parent=5 // pred_check
        %p189 = pneg %p188
      $region30: #{channel_se_layer.2} parent=5 // pred_check_branch
        %191 = sbr.rel (%p189) target = $region32
      $region31: #{channel_se_layer.2} parent=5 // pred_region
        // Predicated region
        $region33: #{channel_se_layer.2} parent=31 // pred_check
          %p192 = pneg %p45
        $region34: #{channel_se_layer.2} parent=31 // pred_check_branch
          %194 = sbr.rel (%p192) target = $region36
        $region35: #{channel_se_layer.2} parent=31 // pred_region
          %s195 = sand.u32 %s35, 1
          %s196 = sand.u32 %s35, 1
          %s197 = smul.addr %s196, 128
          %s198 = scalar_lea.vmem [#allocation2], %s197
          %s199 = smul.u32 4, %s19
          %s200 = smul.addr %s18, 32
          %s201 = sadd.s32 %s199, %s200
          %s202 = smul.addr %s201, 8
          %s203 = scalar_lea.vmem %s0, %s202
          // Predicated region
          $region37: #{channel_se_layer.2} parent=35 // pred_check
            _
          $region38: #{channel_se_layer.2} parent=35 // pred_check_branch
            %205 = sbr.rel (0) target = $region40
          $region39: #{channel_se_layer.2} parent=35 // pred_region
            // Predicated region
            $region41: #{channel_se_layer.2} parent=39 // pred_check
              _
            $region42: #{channel_se_layer.2} parent=39 // pred_check_branch
              %207 = sbr.rel (0) target = $region44
            $region43: #{channel_se_layer.2} parent=39 // pred_region
              loop: start=0, step=1, limit=1
              $region45: #{channel_se_layer.2} parent=43 // loop_pre_header
                _
              $region46: #{channel_se_layer.2} parent=43 // loop_header
                %s209 = sphi 0, %s213
                %p210 = scmp.ge.s32.totalorder %s209, 1
                %s214 = sphi %s203, %s203
                %s215 = sphi %s198, %s198
              $region47: #{channel_se_layer.2} parent=43 // loop_header_branch
                %212 = sbr.rel (%p210) target = $region51
              $region48: #{channel_se_layer.2} parent=43 // loop_body
                %v216 = vld [vmem:[%s214] sm:$0xff]
                %217 = vst [vmem:[%s215] sm:$0xff] %v216
                %v218 = vld [vmem:[%s214 + $0x8] sm:$0xff]
                %219 = vst [vmem:[%s215 + $0x8] sm:$0xff] %v218
                %v220 = vld [vmem:[%s214 + $0x10] sm:$0xff]
                %221 = vst [vmem:[%s215 + $0x10] sm:$0xff] %v220
                %v222 = vld [vmem:[%s214 + $0x18] sm:$0xff]
                %223 = vst [vmem:[%s215 + $0x18] sm:$0xff] %v222
                %v224 = vld [vmem:[%s214 + $0x40] sm:$0xff]
                %225 = vst [vmem:[%s215 + $0x20] sm:$0xff] %v224
                %v226 = vld [vmem:[%s214 + $0x48] sm:$0xff]
                %227 = vst [vmem:[%s215 + $0x28] sm:$0xff] %v226
                %v228 = vld [vmem:[%s214 + $0x50] sm:$0xff]
                %229 = vst [vmem:[%s215 + $0x30] sm:$0xff] %v228
                %v230 = vld [vmem:[%s214 + $0x58] sm:$0xff]
                %231 = vst [vmem:[%s215 + $0x38] sm:$0xff] %v230
                %v232 = vld [vmem:[%s214 + $0x80] sm:$0xff]
                %233 = vst [vmem:[%s215 + $0x40] sm:$0xff] %v232
                %v234 = vld [vmem:[%s214 + $0x88] sm:$0xff]
                %235 = vst [vmem:[%s215 + $0x48] sm:$0xff] %v234
                %v236 = vld [vmem:[%s214 + $0x90] sm:$0xff]
                %237 = vst [vmem:[%s215 + $0x50] sm:$0xff] %v236
                %v238 = vld [vmem:[%s214 + $0x98] sm:$0xff]
                %239 = vst [vmem:[%s215 + $0x58] sm:$0xff] %v238
                %v240 = vld [vmem:[%s214 + $0xc0] sm:$0xff]
                %241 = vst [vmem:[%s215 + $0x60] sm:$0xff] %v240
                %v242 = vld [vmem:[%s214 + $0xc8] sm:$0xff]
                %243 = vst [vmem:[%s215 + $0x68] sm:$0xff] %v242
                %v244 = vld [vmem:[%s214 + $0xd0] sm:$0xff]
                %245 = vst [vmem:[%s215 + $0x70] sm:$0xff] %v244
                %v246 = vld [vmem:[%s214 + $0xd8] sm:$0xff]
                %247 = vst [vmem:[%s215 + $0x78] sm:$0xff] %v246
              $region49: #{channel_se_layer.2} parent=43 // loop_footer
                %s213 = sadd.s32 1, %s209
              $region50: #{channel_se_layer.2} parent=43 // loop_footer_branch
                %208 = sbr.rel target = $region46
              $region51: #{channel_se_layer.2} parent=43 // loop_exit
                _
            $region44: #{channel_se_layer.2} parent=39 // pred_fallthru
              _
            // Predicated region
            $region52: #{channel_se_layer.2} parent=39 // pred_check
              _
            $region53: #{channel_se_layer.2} parent=39 // pred_check_branch
              %249 = sbr.rel target = $region55
            $region54: #{channel_se_layer.2} parent=39 // pred_region
              _
            $region55: #{channel_se_layer.2} parent=39 // pred_fallthru
              _
          $region40: #{channel_se_layer.2} parent=35 // pred_fallthru
            _
          %250 = vnop
        $region36: #{channel_se_layer.2} parent=31 // pred_fallthru
          _
      $region32: #{channel_se_layer.2} parent=5 // pred_fallthru
        _
      %p251 = scmp.le.s32.totalorder 1, %s11
      %p252 = scmp.lt.s32.totalorder %s11, 5
      %p253 = pnand %p251, %p252
      %p254 = pneg %p253
      // Predicated region
      $region56: #{channel_se_layer.2} parent=5 // pred_check
        _
      $region57: #{channel_se_layer.2} parent=5 // pred_check_branch
        %256 = sbr.rel (%p253) target = $region59
      $region58: #{channel_se_layer.2} parent=5 // pred_region
        %s257 = ssub.s32 %s11, 1
        %s258 = sand.u32 %s38, 1
        %s259 = sand.u32 %s38, 1
        %s260 = smul.addr %s259, 128
        %s261 = scalar_lea.vmem [#allocation2], %s260
        // Predicated region
        $region60: #{channel_se_layer.2} parent=58 // pred_check
          %p262 = pneg %p51
        $region61: #{channel_se_layer.2} parent=58 // pred_check_branch
          %264 = sbr.rel (%p262) target = $region63
        $region62: #{channel_se_layer.2} parent=58 // pred_region
          _
        $region63: #{channel_se_layer.2} parent=58 // pred_fallthru
          _
        %s265 = sand.u32 %s38, 1
        %s266 = sand.u32 %s38, 1
        %s267 = smul.addr %s266, 128
        %s268 = scalar_lea.vmem [#allocation2], %s267
        %p269 = pneg %p51
        %p270 = pneg %p48
        %p271 = pneg %p72
        %p272 = pneg %p69
        %p273 = pneg %p93
        %p274 = pneg %p90
        %p275 = pneg %p114
        %p276 = pneg %p111
        %p277 = pneg %p135
        %p278 = pneg %p132
        %p279 = pneg %p161
        %p280 = pneg %p158
        %p281 = scmp.lt.s32.totalorder %s20, 1
        %s282 = scalar_select %p281, %s20, 1
        %s283 = smul.addr %s282, 4
        %s284 = smul.addr %s283, 8
        %s285 = scalar_lea.vmem %s5, %s284
        %s286 = smul.u32 4, %s21
        %p287 = scmp.lt.s32.totalorder %s20, 1
        %s288 = scalar_select %p287, %s20, 1
        %s289 = smul.addr %s288, 4
        %s290 = smul.addr %s289, 8
        %s291 = scalar_lea.vmem %s5, %s290
        %p292 = scmp.eq.s32.totalorder %s21, 0
        // Predicated region
        $region64: #{channel_se_layer.2} parent=58 // pred_check
          %p293 = pneg %p292
        $region65: #{channel_se_layer.2} parent=58 // pred_check_branch
          %295 = sbr.rel (%p293) target = $region67
        $region66: #{channel_se_layer.2} parent=58 // pred_region
          %vm296 = vcmask 7168
          %297 = vst.msk [vmem:[%s291] sm:$0xff] %vm296, 0.0
          %298 = vst.msk [vmem:[%s291 + $0x8] sm:$0xff] %vm296, 0.0
          %299 = vst.msk [vmem:[%s291 + $0x10] sm:$0xff] %vm296, 0.0
          %300 = vst.msk [vmem:[%s291 + $0x18] sm:$0xff] %vm296, 0.0
        $region67: #{channel_se_layer.2} parent=58 // pred_fallthru
          _
        %v301 = vld [vmem:[%s261] sm:$0xff]
        %v302 = vld [vmem:[%s261 + $0x8] sm:$0xff]
        %v303 = vld [vmem:[%s261 + $0x10] sm:$0xff]
        %v304 = vld [vmem:[%s261 + $0x18] sm:$0xff]
        %v305 = vld [vmem:[%s261 + $0x20] sm:$0xff]
        %v306 = vld [vmem:[%s261 + $0x28] sm:$0xff]
        %v307 = vld [vmem:[%s261 + $0x30] sm:$0xff]
        %v308 = vld [vmem:[%s261 + $0x38] sm:$0xff]
        %v309 = vld [vmem:[%s261 + $0x40] sm:$0xff]
        %v310 = vld [vmem:[%s261 + $0x48] sm:$0xff]
        %v311 = vld [vmem:[%s261 + $0x50] sm:$0xff]
        %v312 = vld [vmem:[%s261 + $0x58] sm:$0xff]
        %v313 = vld [vmem:[%s261 + $0x60] sm:$0xff]
        %v314 = vld [vmem:[%s261 + $0x68] sm:$0xff]
        %v315 = vld [vmem:[%s261 + $0x70] sm:$0xff]
        %v316 = vld [vmem:[%s261 + $0x78] sm:$0xff]
        %v317 = vld [vmem:[%s291] sm:$0xff]
        %v318 = vld [vmem:[%s291 + $0x8] sm:$0xff]
        %v319 = vld [vmem:[%s291 + $0x10] sm:$0xff]
        %v320 = vld [vmem:[%s291 + $0x18] sm:$0xff]
        %v321 = vadd.f32 %v301, %v302
        %v322 = vadd.f32 %v321, %v303
        %v323 = vadd.f32 %v322, %v304
        %324 = vadd.xlane.f32.xlu0 %v323
        %v325 = vpop.xlane.xlu0 %324
        %v326 = vadd.f32 %v305, %v306
        %v327 = vadd.f32 %v326, %v307
        %v328 = vadd.f32 %v327, %v308
        %329 = vadd.xlane.f32.xlu0 %v328
        %v330 = vpop.xlane.xlu0 %329
        %v331 = vadd.f32 %v309, %v310
        %v332 = vadd.f32 %v331, %v311
        %v333 = vadd.f32 %v332, %v312
        %334 = vadd.xlane.f32.xlu0 %v333
        %v335 = vpop.xlane.xlu0 %334
        %v336 = vadd.f32 %v313, %v314
        %v337 = vadd.f32 %v336, %v315
        %v338 = vadd.f32 %v337, %v316
        %339 = vadd.xlane.f32.xlu0 %v338
        %v340 = vpop.xlane.xlu0 %339
        %v341 = vadd.f32 %v317, %v325
        %v342 = vadd.f32 %v318, %v330
        %v343 = vadd.f32 %v319, %v335
        %v344 = vadd.f32 %v320, %v340
        %vm345 = vcmask 7168
        %346 = vst.msk [vmem:[%s291] sm:$0xff] %vm345, %v341
        %347 = vst.msk [vmem:[%s291 + $0x8] sm:$0xff] %vm345, %v342
        %348 = vst.msk [vmem:[%s291 + $0x10] sm:$0xff] %vm345, %v343
        %349 = vst.msk [vmem:[%s291 + $0x18] sm:$0xff] %vm345, %v344
        %p350 = scmp.eq.s32.totalorder %s21, 1
        // Predicated region
        $region68: #{channel_se_layer.2} parent=58 // pred_check
          %p351 = pneg %p350
        $region69: #{channel_se_layer.2} parent=58 // pred_check_branch
          %353 = sbr.rel (%p351) target = $region71
        $region70: #{channel_se_layer.2} parent=58 // pred_region
          %v354 = vld [vmem:[%s291] sm:$0xff]
          %v355 = vld [vmem:[%s291 + $0x8] sm:$0xff]
          %v356 = vld [vmem:[%s291 + $0x10] sm:$0xff]
          %v357 = vld [vmem:[%s291 + $0x18] sm:$0xff]
          %v358 = vmul.f32 %v354, 0.0009765625
          %v359 = vmul.f32 %v355, 0.0009765625
          %v360 = vmul.f32 %v356, 0.0009765625
          %v361 = vmul.f32 %v357, 0.0009765625
          %363 = vset.pattern.permute.xlu0 0
          %364 = vperm.xlu0 %363, %v358
          %v365 = vpop.permute.xlu0 %364
          %368 = vset.pattern.permute.xlu0 0
          %369 = vperm.xlu0 %368, %v359
          %v370 = vpop.permute.xlu0 %369
          %373 = vset.pattern.permute.xlu0 0
          %374 = vperm.xlu0 %373, %v360
          %v375 = vpop.permute.xlu0 %374
          %378 = vset.pattern.permute.xlu0 0
          %379 = vperm.xlu0 %378, %v361
          %v380 = vpop.permute.xlu0 %379
          %v382 = vld [vmem:[%s1] sm:$0xf]
          %v383 = vld [vmem:[%s2] sm:$0xf]
          %385 = vset.pattern.permute.xlu0 0
          %386 = vperm.xlu0 %385, %v383
          %v387 = vpop.permute.xlu0 %386
          %vm389 = vcmask 261120
          %v391 = vsel %vm389, %v382, 0
          %393 = vmatprep.subr.mxu0 0.0
          %394 = vmatpush1.msra.mxu0 0.0
          %395 = vmatprep.subr.mxu0 0.0
          %396 = vmatpush1.msra.mxu0 0.0
          %397 = vmatprep.subr.mxu0 0.0
          %398 = vmatpush1.msra.mxu0 0.0
          %399 = vmatprep.subr.mxu0 0.0
          %400 = vmatpush1.msra.mxu0 0.0
          %401 = vmatprep.subr.mxu0 0.0
          %402 = vmatpush1.msra.mxu0 0.0
          %403 = vmatprep.subr.mxu0 0.0
          %404 = vmatpush1.msra.mxu0 0.0
          %405 = vmatprep.subr.mxu0 0.0
          %406 = vmatpush1.msra.mxu0 0.0
          %407 = vmatprep.subr.mxu0 0.0
          %408 = vmatpush1.msra.mxu0 0.0
          %409 = vmatprep.subr.mxu0 0.0
          %410 = vmatpush1.msra.mxu0 0.0
          %411 = vmatprep.subr.mxu0 0.0
          %412 = vmatpush1.msra.mxu0 0.0
          %413 = vmatprep.subr.mxu0 0.0
          %414 = vmatpush1.msra.mxu0 0.0
          %415 = vmatprep.subr.mxu0 0.0
          %416 = vmatpush1.msra.mxu0 0.0
          %417 = vmatprep.subr.mxu0 0.0
          %418 = vmatpush1.msra.mxu0 %v380
          %419 = vmatprep.subr.mxu0 0.0
          %420 = vmatpush1.msra.mxu0 %v375
          %421 = vmatprep.subr.mxu0 0.0
          %422 = vmatpush1.msra.mxu0 %v370
          %423 = vmatprep.subr.mxu0 0.0
          %424 = vmatpush1.msra.mxu0 %v365
          %425 = vmatprep.subr.mxu0 0.0
          %426 = vmatpush2.msra.mxu0 0.0
          %427 = vmatprep.subr.mxu0 0.0
          %428 = vmatpush2.msra.mxu0 0.0
          %429 = vmatprep.subr.mxu0 0.0
          %430 = vmatpush2.msra.mxu0 0.0
          %431 = vmatprep.subr.mxu0 0.0
          %432 = vmatpush2.msra.mxu0 0.0
          %433 = vmatprep.subr.mxu0 0.0
          %434 = vmatpush2.msra.mxu0 0.0
          %435 = vmatprep.subr.mxu0 0.0
          %436 = vmatpush2.msra.mxu0 0.0
          %437 = vmatprep.subr.mxu0 0.0
          %438 = vmatpush2.msra.mxu0 0.0
          %439 = vmatprep.subr.mxu0 0.0
          %440 = vmatpush2.msra.mxu0 0.0
          %441 = vmatprep.subr.mxu0 0.0
          %442 = vmatpush2.msra.mxu0 0.0
          %443 = vmatprep.subr.mxu0 0.0
          %444 = vmatpush2.msra.mxu0 0.0
          %445 = vmatprep.subr.mxu0 0.0
          %446 = vmatpush2.msra.mxu0 0.0
          %447 = vmatprep.subr.mxu0 0.0
          %448 = vmatpush2.msra.mxu0 0.0
          %449 = vmatprep.subr.mxu0 0.0
          %450 = vmatpush2.msra.mxu0 0.0
          %451 = vmatprep.subr.mxu0 0.0
          %452 = vmatpush2.msra.mxu0 0.0
          %453 = vmatprep.subr.mxu0 0.0
          %454 = vmatpush2.msra.mxu0 0.0
          %455 = vmatprep.subr.mxu0 0.0
          %456 = vmatpush2.msra.mxu0 0.0
          %457 = vmatprep.mubr.f32.mxu0 0.0
          %458 = vmatmul.mubr.f32.gmra.mxu0 %v391
          %v459 = vpop.f32.mrf.mxu0
          %v460 = vadd.f32 %v387, %v459
          %v461 = vpop.f32.mrf.mxu0
          %462 = vdwg.mxu0
          %v463 = vmax.f32 %v460, 0.0
          %v464 = vld [vmem:[%s3] sm:$0xff]
          %v465 = vld [vmem:[%s3 + $0x8] sm:$0xff]
          %v466 = vld [vmem:[%s3 + $0x10] sm:$0xff]
          %v467 = vld [vmem:[%s3 + $0x18] sm:$0xff]
          %v468 = vld [vmem:[%s4] sm:$0xff]
          %v469 = vld [vmem:[%s4 + $0x8] sm:$0xff]
          %v470 = vld [vmem:[%s4 + $0x10] sm:$0xff]
          %v471 = vld [vmem:[%s4 + $0x18] sm:$0xff]
          %473 = vset.pattern.permute.xlu0 0
          %474 = vperm.xlu0 %473, %v468
          %v475 = vpop.permute.xlu0 %474
          %478 = vset.pattern.permute.xlu0 0
          %479 = vperm.xlu0 %478, %v469
          %v480 = vpop.permute.xlu0 %479
          %483 = vset.pattern.permute.xlu0 0
          %484 = vperm.xlu0 %483, %v470
          %v485 = vpop.permute.xlu0 %484
          %488 = vset.pattern.permute.xlu0 0
          %489 = vperm.xlu0 %488, %v471
          %v490 = vpop.permute.xlu0 %489
          %vm492 = vcmask 31744
          %v494 = vsel %vm492, %v464, 0
          %v497 = vsel %vm492, %v465, 0
          %v500 = vsel %vm492, %v466, 0
          %v503 = vsel %vm492, %v467, 0
          %vm505 = vcmask 1043456
          %v507 = vsel %vm505, %v463, 0
          %509 = vmatprep.subr.mxu0 0.0
          %510 = vmatpush1.msra.mxu0 0.0
          %511 = vmatprep.subr.mxu0 0.0
          %512 = vmatpush1.msra.mxu0 0.0
          %513 = vmatprep.subr.mxu0 0.0
          %514 = vmatpush1.msra.mxu0 0.0
          %515 = vmatprep.subr.mxu0 0.0
          %516 = vmatpush1.msra.mxu0 0.0
          %517 = vmatprep.subr.mxu0 0.0
          %518 = vmatpush1.msra.mxu0 0.0
          %519 = vmatprep.subr.mxu0 0.0
          %520 = vmatpush1.msra.mxu0 0.0
          %521 = vmatprep.subr.mxu0 0.0
          %522 = vmatpush1.msra.mxu0 0.0
          %523 = vmatprep.subr.mxu0 0.0
          %524 = vmatpush1.msra.mxu0 0.0
          %525 = vmatprep.subr.mxu0 0.0
          %526 = vmatpush1.msra.mxu0 0.0
          %527 = vmatprep.subr.mxu0 0.0
          %528 = vmatpush1.msra.mxu0 0.0
          %529 = vmatprep.subr.mxu0 0.0
          %530 = vmatpush1.msra.mxu0 0.0
          %531 = vmatprep.subr.mxu0 0.0
          %532 = vmatpush1.msra.mxu0 0.0
          %533 = vmatprep.subr.mxu0 0.0
          %534 = vmatpush1.msra.mxu0 0.0
          %535 = vmatprep.subr.mxu0 0.0
          %536 = vmatpush1.msra.mxu0 0.0
          %537 = vmatprep.subr.mxu0 0.0
          %538 = vmatpush1.msra.mxu0 0.0
          %539 = vmatprep.subr.mxu0 0.0
          %540 = vmatpush1.msra.mxu0 %v507
          %541 = vmatprep.subr.mxu0 0.0
          %542 = vmatpush2.msra.mxu0 0.0
          %543 = vmatprep.subr.mxu0 0.0
          %544 = vmatpush2.msra.mxu0 0.0
          %545 = vmatprep.subr.mxu0 0.0
          %546 = vmatpush2.msra.mxu0 0.0
          %547 = vmatprep.subr.mxu0 0.0
          %548 = vmatpush2.msra.mxu0 0.0
          %549 = vmatprep.subr.mxu0 0.0
          %550 = vmatpush2.msra.mxu0 0.0
          %551 = vmatprep.subr.mxu0 0.0
          %552 = vmatpush2.msra.mxu0 0.0
          %553 = vmatprep.subr.mxu0 0.0
          %554 = vmatpush2.msra.mxu0 0.0
          %555 = vmatprep.subr.mxu0 0.0
          %556 = vmatpush2.msra.mxu0 0.0
          %557 = vmatprep.subr.mxu0 0.0
          %558 = vmatpush2.msra.mxu0 0.0
          %559 = vmatprep.subr.mxu0 0.0
          %560 = vmatpush2.msra.mxu0 0.0
          %561 = vmatprep.subr.mxu0 0.0
          %562 = vmatpush2.msra.mxu0 0.0
          %563 = vmatprep.subr.mxu0 0.0
          %564 = vmatpush2.msra.mxu0 0.0
          %565 = vmatprep.subr.mxu0 0.0
          %566 = vmatpush2.msra.mxu0 0.0
          %567 = vmatprep.subr.mxu0 0.0
          %568 = vmatpush2.msra.mxu0 0.0
          %569 = vmatprep.subr.mxu0 0.0
          %570 = vmatpush2.msra.mxu0 0.0
          %571 = vmatprep.subr.mxu0 0.0
          %572 = vmatpush2.msra.mxu0 0.0
          %573 = vmatprep.mubr.f32.mxu0 0.0
          %574 = vmatmul.mubr.f32.gmra.mxu0 %v494
          %v575 = vpop.f32.mrf.mxu0
          %v576 = vadd.f32 %v475, %v575
          %v577 = vpop.f32.mrf.mxu0
          %578 = vmatprep.mubr.f32.mxu0 0.0
          %579 = vmatmul.mubr.f32.gmra.mxu0 %v497
          %v580 = vpop.f32.mrf.mxu0
          %v581 = vadd.f32 %v480, %v580
          %v582 = vpop.f32.mrf.mxu0
          %583 = vmatprep.mubr.f32.mxu0 0.0
          %584 = vmatmul.mubr.f32.gmra.mxu0 %v500
          %v585 = vpop.f32.mrf.mxu0
          %v586 = vadd.f32 %v485, %v585
          %v587 = vpop.f32.mrf.mxu0
          %588 = vmatprep.mubr.f32.mxu0 0.0
          %589 = vmatmul.mubr.f32.gmra.mxu0 %v503
          %v590 = vpop.f32.mrf.mxu0
          %v591 = vadd.f32 %v490, %v590
          %v592 = vpop.f32.mrf.mxu0
          %593 = vdwg.mxu0
          %v594 = vsub.f32 0.0, %v576
          %v595 = vsub.f32 0.0, %v581
          %v596 = vsub.f32 0.0, %v586
          %v597 = vsub.f32 0.0, %v591
          %v598 = vmul.f32 %v594, 1.442695
          %v599 = vpow.pop %v598
          %v600 = vmul.f32 %v595, 1.442695
          %v601 = vpow.pop %v600
          %v602 = vmul.f32 %v596, 1.442695
          %v603 = vpow.pop %v602
          %v604 = vmul.f32 %v597, 1.442695
          %v605 = vpow.pop %v604
          %v606 = vadd.f32 %v599, 1.0
          %v607 = vadd.f32 %v601, 1.0
          %v608 = vadd.f32 %v603, 1.0
          %v609 = vadd.f32 %v605, 1.0
          %v610 = vrcp.pop %v606
          %v611 = vmul.f32 1.0, %v610
          %v612 = vrcp.pop %v607
          %v613 = vmul.f32 1.0, %v612
          %v614 = vrcp.pop %v608
          %v615 = vmul.f32 1.0, %v614
          %v616 = vrcp.pop %v609
          %v617 = vmul.f32 1.0, %v616
          %618 = vst.msk [vmem:[%s291] sm:$0xff] %vm345, %v611
          %619 = vst.msk [vmem:[%s291 + $0x8] sm:$0xff] %vm345, %v613
          %620 = vst.msk [vmem:[%s291 + $0x10] sm:$0xff] %vm345, %v615
          %621 = vst.msk [vmem:[%s291 + $0x18] sm:$0xff] %vm345, %v617
        $region71: #{channel_se_layer.2} parent=58 // pred_fallthru
          _
        %p622 = scmp.lt.s32.totalorder %s20, 1
        %s623 = scalar_select %p622, %s20, 1
        %s624 = smul.addr %s623, 4
        %s625 = smul.addr %s624, 8
        %s626 = scalar_lea.vmem %s5, %s625
        // Predicated region
        $region72: #{channel_se_layer.2} parent=58 // pred_check
          %p627 = pneg %p158
        $region73: #{channel_se_layer.2} parent=58 // pred_check_branch
          %629 = sbr.rel (%p627) target = $region75
        $region74: #{channel_se_layer.2} parent=58 // pred_region
          _
        $region75: #{channel_se_layer.2} parent=58 // pred_fallthru
          _
      $region59: #{channel_se_layer.2} parent=5 // pred_fallthru
        _
      %p630 = scmp.le.s32.totalorder 2, %s11
      // Predicated region
      $region76: #{channel_se_layer.2} parent=5 // pred_check
        %p631 = pneg %p630
      $region77: #{channel_se_layer.2} parent=5 // pred_check_branch
        %633 = sbr.rel (%p631) target = $region79
      $region78: #{channel_se_layer.2} parent=5 // pred_region
        %s634 = ssub.s32 %s11, 2
        // Predicated region
        $region80: #{channel_se_layer.2} parent=78 // pred_check
          %p635 = pneg %p164
        $region81: #{channel_se_layer.2} parent=78 // pred_check_branch
          %637 = sbr.rel (%p635) target = $region83
        $region82: #{channel_se_layer.2} parent=78 // pred_region
          %p638 = scmp.lt.s32.totalorder %s22, 1
          %s639 = scalar_select %p638, %s22, 1
          %s640 = smul.addr %s639, 4
          %s641 = smul.addr %s640, 8
          %s642 = scalar_lea.vmem %s5, %s641
        $region83: #{channel_se_layer.2} parent=78 // pred_fallthru
          _
      $region79: #{channel_se_layer.2} parent=5 // pred_fallthru
        _
    $region6: #{channel_se_layer.2} parent=1 // loop_footer
      %s15 = sadd.s32 1, %s11
    $region7: #{channel_se_layer.2} parent=1 // loop_footer_branch
      %10 = sbr.rel target = $region3
    $region8: #{channel_se_layer.2} parent=1 // loop_exit
      _

</llo_original>
